<compile_context>
chip_gen: v6e
topology: v6e:2x2x1
jax: 0.10.0
libtpu: 0.0.40
codegen_flags: <defaults>
</compile_context>

<pallas_src>
import functools

import jax
import jax.numpy as jnp
from jax.experimental import pallas as pl
from jax.experimental.pallas import tpu as pltpu


def _round_up(a: int, b: int) -> int:
    return ((a + b - 1) // b) * b


def _tv_kernel(x_ref, partial_ref, *, n_planes, block_planes, chunk_planes,
               width, mask_tail):
    """x_ref: (block_planes, P) VMEM block of flattened H*W planes.
    partial_ref: (1, 1) f32 SMEM scalar holding this block's TV partial sum."""
    P = x_ref.shape[-1]

    # Edge-validity masks, built once per block at chunk size (hoisted out of
    # the accumulation loop; no block-sized temporaries).
    col = jax.lax.broadcasted_iota(jnp.int32, (chunk_planes, P), 1)
    if (width & (width - 1)) == 0:                 # power-of-two fast path
        col_in_row = jnp.bitwise_and(col, width - 1)
    else:
        col_in_row = col % width
    h_valid = col_in_row != (width - 1)            # drop last column of each row
    v_valid = col < (P - width)                    # drop last row

    block_start = pl.program_id(0) * block_planes

    def chunk_sum(xc, plane_start):
        # xc: (chunk_planes, P) in the input dtype (bf16 stays bf16 for diffs).
        nbr_h = pltpu.roll(xc, shift=P - 1, axis=1)       # xc[:, (j+1) mod P]
        nbr_v = pltpu.roll(xc, shift=P - width, axis=1)   # xc[:, (j+W) mod P]
        dh = jnp.abs(xc - nbr_h).astype(jnp.float32)
        dv = jnp.abs(xc - nbr_v).astype(jnp.float32)
        s = jnp.where(h_valid, dh, 0.0) + jnp.where(v_valid, dv, 0.0)
        if mask_tail:
            # Planes past n_planes are Pallas padding (undefined data, possibly
            # NaN/Inf): select (not multiply) them away before accumulation.
            plane = plane_start + jax.lax.broadcasted_iota(jnp.int32, s.shape, 0)
            s = jnp.where(plane < n_planes, s, 0.0)
        return s

    num_chunks = block_planes // chunk_planes
    if num_chunks == 1:
        acc = chunk_sum(x_ref[...], block_start)
    else:
        def body(c, acc):
            start = pl.multiple_of(c * chunk_planes, 8)
            xc = x_ref[pl.ds(start, chunk_planes), :]
            return acc + chunk_sum(xc, block_start + start)

        acc = jax.lax.fori_loop(
            0, num_chunks, body,
            jnp.zeros((chunk_planes, P), jnp.float32),
            unroll=num_chunks <= 8)

    # One cross-lane/sublane reduce per block.
    partial_ref[0, 0] = jnp.sum(acc)


def total_variation_loss(x, weight=1.0, *,
                         block_bytes=8 * 1024 * 1024,
                         temp_bytes=1 * 1024 * 1024):
    """Returns (input_passthrough, tv_loss) matching the PyTorch module:
    forward() returns `input`; `self.loss` is the weighted TV sum."""
    B, C, H, W = x.shape
    N = B * C
    P = H * W
    # Lane-dense layout: one flattened plane per row (contiguous reshape, free).
    x_flat = x.reshape(N, P)

    itemsize = jnp.dtype(x.dtype).itemsize
    plane_bytes = P * itemsize
    SUB = 8  # sublane granularity

    # Planes per inner accumulation chunk: bounds the live f32 temporaries
    # (~4 chunk-sized f32 arrays) to roughly temp_bytes.
    chunk = min(_round_up(N, SUB),
                max(SUB, (temp_bytes // max(16 * P, 1)) // SUB * SUB))
    # Planes per grid block: fill block_bytes of input, multiple of `chunk`.
    T = max(chunk, (block_bytes // max(plane_bytes, 1)) // chunk * chunk)
    T = min(T, _round_up(N, chunk))
    if N * plane_bytes > 4 * 1024 * 1024:
        # Keep several blocks so BlockSpec double-buffering overlaps DMA with
        # compute and both v7x TensorCores get work (grid axis is "parallel").
        T = min(T, max(chunk, _round_up(pl.cdiv(N, 4), chunk)))
    # TODO(synk): planes bigger than block_bytes (huge H*W) would additionally
    # need H-tiling with a 1-row overlap; not required for this module's shapes.

    num_blocks = pl.cdiv(N, T)
    mask_tail = (num_blocks * T) != N

    kernel = functools.partial(
        _tv_kernel, n_planes=N, block_planes=T, chunk_planes=chunk,
        width=W, mask_tail=mask_tail)

    partials = pl.pallas_call(
        kernel,
        out_shape=jax.ShapeDtypeStruct((num_blocks, 1), jnp.float32),
        grid_spec=pltpu.PrefetchScalarGridSpec(
            num_scalar_prefetch=0,
            grid=(num_blocks,),
            in_specs=[pl.BlockSpec((T, P), lambda i: (i, 0))],
            out_specs=pl.BlockSpec((1, 1), lambda i: (i, 0),
                                   memory_space=pltpu.SMEM),
        ),
        compiler_params=pltpu.CompilerParams(
            dimension_semantics=("parallel",),
            # 2 x 8 MiB double-buffered input + bounded temps; safe on v7x's
            # 64 MiB VMEM, raises the 16/32 MiB scoped default on v5e/v6e.
            vmem_limit_bytes=48 * 1024 * 1024),
        cost_estimate=pl.CostEstimate(
            flops=8 * N * P,
            transcendentals=0,
            bytes_accessed=N * plane_bytes + num_blocks * 4),
    )(x_flat)

    loss = jnp.float32(weight) * jnp.sum(partials)
    return x, loss


def _reference_tv_loss(x, weight=1.0):
    x = x.astype(jnp.float32)
    h = jnp.sum(jnp.abs(x[:, :, :, :-1] - x[:, :, :, 1:]))
    v = jnp.sum(jnp.abs(x[:, :, :-1, :] - x[:, :, 1:, :]))
    return weight * (h + v)


if __name__ == "__main__":
    key = jax.random.PRNGKey(0)
    k1, k2 = jax.random.split(key)

    # Case 1: canonical shape (2,4,16,16) -> one block, one chunk, no tail mask.
    x1 = jax.random.normal(k1, (2, 4, 16, 16), dtype=jnp.float32)
    out1, loss1 = total_variation_loss(x1, weight=1.0)
    jax.block_until_ready(out1)
    jax.block_until_ready(loss1)
    ref1 = _reference_tv_loss(x1, 1.0)
    assert jnp.allclose(out1, x1), "forward must return the input unchanged"
    assert jnp.allclose(loss1, ref1, rtol=1e-4, atol=1e-2), (loss1, ref1)

    # Case 2: N=15 planes -> single padded block (exercises the tail mask).
    x2 = jax.random.normal(k2, (3, 5, 16, 16), dtype=jnp.float32)
    ref2 = _reference_tv_loss(x2, 0.5)
    out2, loss2 = total_variation_loss(x2, weight=0.5)
    jax.block_until_ready(out2)
    jax.block_until_ready(loss2)
    assert jnp.allclose(out2, x2), "forward must return the input unchanged"
    assert jnp.allclose(loss2, ref2, rtol=1e-4, atol=1e-2), (loss2, ref2)

    # Case 3: force a multi-block grid with a ragged, masked last block.
    plane_bytes = 16 * 16 * 4
    _, loss3 = total_variation_loss(x2, weight=0.5,
                                    block_bytes=8 * plane_bytes,
                                    temp_bytes=32 * 1024)
    jax.block_until_ready(loss3)
    assert jnp.allclose(loss3, ref2, rtol=1e-4, atol=1e-2), (loss3, ref2)

    # Case 4: force the multi-chunk in-kernel accumulation loop.
    _, loss4 = total_variation_loss(x2, weight=0.5, temp_bytes=32 * 1024)
    jax.block_until_ready(loss4)
    assert jnp.allclose(loss4, ref2, rtol=1e-4, atol=1e-2), (loss4, ref2)

    print("KERNEL_OK")
</pallas_src>

<mosaic_0001>
module attributes {stable_mosaic.version = 11 : i64} {
  func.func @_tv_kernel(%arg0: i32, %arg1: memref<8x256xf32, #tpu.memory_space<vmem>>, %arg2: memref<1x1xf32, #tpu.memory_space<smem>>) attributes {dimension_semantics = [#tpu.dimension_semantics<parallel>], iteration_bounds = array<i64: 1>, scalar_prefetch = 0 : i64, scratch_operands = 0 : i64, tpu.core_type = #tpu.core_type<tc>, window_params = [{transform_indices = @transform_0, window_bounds = array<i64: 8, 256>}, {transform_indices = @transform_1, window_bounds = array<i64: 1, 1>}]} {
    %0 = tpu.iota {dimensions = array<i32: 1>} : vector<8x256xi32>
    %c15_i32 = arith.constant 15 : i32
    %1 = vector.broadcast %c15_i32 : i32 to vector<8x256xi32>
    %2 = arith.andi %0, %1 : vector<8x256xi32>
    %c15_i32_0 = arith.constant 15 : i32
    %3 = vector.broadcast %c15_i32_0 : i32 to vector<8x256xi32>
    %4 = arith.cmpi ne, %2, %3 : vector<8x256xi32>
    %c240_i32 = arith.constant 240 : i32
    %5 = vector.broadcast %c240_i32 : i32 to vector<8x256xi32>
    %6 = arith.cmpi slt, %0, %5 : vector<8x256xi32>
    %c0 = arith.constant 0 : index
    %c0_1 = arith.constant 0 : index
    %7 = vector.load %arg1[%c0, %c0_1] : memref<8x256xf32, #tpu.memory_space<vmem>>, vector<8x256xf32>
    %c255_i32 = arith.constant 255 : i32
    %8 = tpu.dynamic_rotate %7 by %c255_i32 dim 1 : vector<8x256xf32>, i32 -> vector<8x256xf32>
    %c240_i32_2 = arith.constant 240 : i32
    %9 = tpu.dynamic_rotate %7 by %c240_i32_2 dim 1 : vector<8x256xf32>, i32 -> vector<8x256xf32>
    %10 = arith.subf %7, %8 : vector<8x256xf32>
    %11 = math.absf %10 : vector<8x256xf32>
    %12 = arith.subf %7, %9 : vector<8x256xf32>
    %13 = math.absf %12 : vector<8x256xf32>
    %cst = arith.constant 0.000000e+00 : f32
    %14 = vector.broadcast %cst : f32 to vector<8x256xf32>
    %15 = arith.select %4, %11, %14 : vector<8x256xi1>, vector<8x256xf32>
    %cst_3 = arith.constant 0.000000e+00 : f32
    %16 = vector.broadcast %cst_3 : f32 to vector<8x256xf32>
    %17 = arith.select %6, %13, %16 : vector<8x256xi1>, vector<8x256xf32>
    %18 = arith.addf %15, %17 : vector<8x256xf32>
    %19 = vector.shape_cast %18 : vector<8x256xf32> to vector<1x8x256xf32>
    %cst_4 = arith.constant dense<0.000000e+00> : vector<1xf32>
    %20 = vector.multi_reduction <add>, %19, %cst_4 [1, 2] : vector<1x8x256xf32> to vector<1xf32>
    %21 = vector.shape_cast %20 : vector<1xf32> to vector<1x1x1xf32>
    %22 = vector.extract %21[0, 0, 0] : f32 from vector<1x1x1xf32>
    %c0_5 = arith.constant 0 : index
    %c0_6 = arith.constant 0 : index
    %23 = memref.load %arg2[%c0_5, %c0_6] : memref<1x1xf32, #tpu.memory_space<smem>>
    memref.store %22, %arg2[%c0_5, %c0_6] : memref<1x1xf32, #tpu.memory_space<smem>>
    return
  }
  func.func @transform_0(%arg0: i32) -> (i32, i32) {
    %c0_i32 = arith.constant 0 : i32
    %c0_i32_0 = arith.constant 0 : i32
    return %arg0, %c0_i32 : i32, i32
  }
  func.func @transform_1(%arg0: i32) -> (i32, i32) {
    %c0_i32 = arith.constant 0 : i32
    %c0_i32_0 = arith.constant 0 : i32
    return %arg0, %c0_i32 : i32, i32
  }
}

</mosaic_0001>

<llo_original>
// kernel: tpu_custom_call.1
$region0: #{tpu_custom_call.1}
  #allocation0 [shape = 'u32[]', space=smem, size = 0x4, offset = 0x4, fixed_abs, tag = 'smem constant byte address 0x4 - core index']
  #allocation1 [shape = 'u32[144,128]{1,0:T(1,128)}', space=vmem, size = 0x12000, scoped, tag = 'internal scratch']
  %s0 = inlined_call_operand.hbm [shape: f32[8,256], index: 0, kind: input, shape index: {}]
  %s1 = inlined_call_operand.hbm [shape: f32[1,1], index: 1, kind: output, shape index: {}]
  %s2 = sld [smem:[#allocation0]]
  $region18: #{tpu_custom_call.1} parent=0
    _
  %s4 = ssub.s32 1, %s2
  %s5 = scalar_select 0, %s4, %s2
  $region1: #{tpu_custom_call.1} parent=0
    #allocation2 [shape = 'u8[8192]{0}', space=vmem, size = 0x2000, scoped, tag = 'input window, operand 0, single buffered']
    #allocation3 [shape = 's32[1]{0}', space=sflag, size = 0x4, scoped, tag = 'scoped memory for tpu_custom_call.1']
    #allocation4 [shape = 's32[1]{0}', space=sflag, size = 0x4, scoped, tag = 'scoped memory for tpu_custom_call.1']
    #allocation5 [shape = 'u8[512]{0}', space=smem, size = 0x200, scoped, tag = 'output window, operand 0, single buffered']
    %6 = vsyncpa [#allocation3], 0
    %7 = vsyncpa [#allocation4], 0
    // Predicated region
    $region2: #{tpu_custom_call.1} parent=1 // pred_check
      _
    $region3: #{tpu_custom_call.1} parent=1 // pred_check_branch
      %9 = sbr.rel (0) target = $region5
    $region4: #{tpu_custom_call.1} parent=1 // pred_region
      %s11 = ssub.s32 256, 256
      %12 = vsyncadd [#allocation3], %s11
      %s14 = sshll.u32 [#allocation2], 4
      %s15 = int_to_ptr.vmem [resolvable:$true] %s14
      %17 = dma.hbm_to_vmem [thread:$0]  %s0, 256, %s15, [#allocation3]
    $region5: #{tpu_custom_call.1} parent=1 // pred_fallthru
      _
    // Predicated region
    $region6: #{tpu_custom_call.1} parent=1 // pred_check
      _
    $region7: #{tpu_custom_call.1} parent=1 // pred_check_branch
      %19 = sbr.rel (0) target = $region9
    $region8: #{tpu_custom_call.1} parent=1 // pred_region
      %20 = dma.done [#allocation3], 256
    $region9: #{tpu_custom_call.1} parent=1 // pred_fallthru
      _
    %v21 = vlaneseq
    %v22 = vand.u32 %v21, 127
    %v23 = vadd.s32 %v22, 128
    %v24 = vand.u32 %v22, 15
    %v25 = vand.u32 %v23, 15
    %vm26 = vcmp.ne.s32.totalorder %v24, 15
    %vm27 = vcmp.ne.s32.totalorder %v25, 15
    %vm28 = vcmp.lt.s32.totalorder %v22, 240
    %vm29 = vcmp.lt.s32.totalorder %v23, 240
    %v30 = vld [vmem:[#allocation2] sm:$0xff]
    %v31 = vld [vmem:[#allocation2 + $0x8] sm:$0xff]
    %32 = vrot.lane.b32.xlu0 %v30, 127
    %v33 = vpop.permute.xlu0 %32
    %34 = vrot.lane.b32.xlu0 %v31, 127
    %v35 = vpop.permute.xlu0 %34
    %vm36 = vcmp.lt.s32.totalorder %v22, 127
    %v37 = vsel %vm36, %v33, %v35
    %v38 = vsel %vm36, %v35, %v33
    %39 = vrot.lane.b32.xlu0 %v30, 112
    %v40 = vpop.permute.xlu0 %39
    %41 = vrot.lane.b32.xlu0 %v31, 112
    %v42 = vpop.permute.xlu0 %41
    %vm43 = vcmp.lt.s32.totalorder %v22, 112
    %v44 = vsel %vm43, %v40, %v42
    %v45 = vsel %vm43, %v42, %v40
    %v46 = vsub.f32 %v30, %v37
    %v47 = vsub.f32 %v31, %v38
    %v48 = vand.u32 2147483647, %v46
    %v49 = vand.u32 2147483647, %v47
    %v50 = vsub.f32 %v30, %v44
    %v51 = vsub.f32 %v31, %v45
    %v52 = vand.u32 2147483647, %v50
    %v53 = vand.u32 2147483647, %v51
    %v54 = vsel %vm26, %v48, 0.0
    %v55 = vsel %vm27, %v49, 0.0
    %v56 = vsel %vm28, %v52, 0.0
    %v57 = vsel %vm29, %v53, 0.0
    %v58 = vadd.f32 %v54, %v56
    %v59 = vadd.f32 %v55, %v57
    %v60 = vadd.f32 %v58, %v59
    %61 = vadd.xlane.f32.xlu0 %v60
    %v62 = vpop.xlane.xlu0 %61
    %v63 = vrot.slane %v62, 4
    %v64 = vadd.f32 %v62, %v63
    %v65 = vrot.slane %v64, 2
    %v66 = vadd.f32 %v64, %v65
    %v67 = vrot.slane %v66, 1
    %v68 = vadd.f32 %v66, %v67
    %s69 = vtos %v68
    %s70 = scalar_lea.smem [#allocation5], 0
    %71 = sst [smem:[%s70]] %s69
    // Predicated region
    $region10: #{tpu_custom_call.1} parent=1 // pred_check
      _
    $region11: #{tpu_custom_call.1} parent=1 // pred_check_branch
      %73 = sbr.rel (0) target = $region13
    $region12: #{tpu_custom_call.1} parent=1 // pred_region
      %s75 = ssub.s32 16, 16
      %76 = vsyncadd [#allocation4], %s75
      %79 = dma.smem_to_hbm [#allocation5], 16, %s1, [#allocation4]
    $region13: #{tpu_custom_call.1} parent=1 // pred_fallthru
      _
    // Predicated region
    $region14: #{tpu_custom_call.1} parent=1 // pred_check
      _
    $region15: #{tpu_custom_call.1} parent=1 // pred_check_branch
      %81 = sbr.rel (0) target = $region17
    $region16: #{tpu_custom_call.1} parent=1 // pred_region
      %82 = dma.done [#allocation4], 16
    $region17: #{tpu_custom_call.1} parent=1 // pred_fallthru
      _
    %83 = sfence
    %84 = vsyncpa [#allocation3], 1
    %85 = vsyncpa [#allocation4], 1

</llo_original>
